<compile_context>
chip_gen: v6e
topology: v6e:2x2x1
jax: 0.10.0
libtpu: 0.0.40
codegen_flags: <defaults>
</compile_context>

<pallas_src>
import functools

import jax
import jax.numpy as jnp
from jax.experimental import pallas as pl
from jax.experimental.pallas import tpu as pltpu


def _ode_net_kernel(x_ref, w2_ref, cols_ref, b3_ref, o_ref):
    # Hoisted loads / slices (outside any future inner loop).
    x_row = x_ref[...]                       # (1, TN)  batch on lanes
    w2 = w2_ref[...]                         # (H, H)   PyTorch (out, in)
    cols = cols_ref[...]                     # (H, 4) = [ w1 | b1 | b2 | w3 ]
    w1_col = cols[:, 0:1]                    # (H, 1)
    b1_col = cols[:, 1:2]                    # (H, 1)
    b2_col = cols[:, 2:3]                    # (H, 1)
    w3_col = cols[:, 3:4]                    # (H, 1)

    # layer 1: degenerate K=1 contraction -> broadcast multiply-add on the VPU,
    # tanh on the EUP.
    h = jnp.tanh(w1_col * x_row + b1_col)    # (H, TN)

    # layer 2: lane-dense MXU matmul (H,H) @ (H,TN); bias add stays on the VPU
    # so it co-issues under the EUP tanh pushes.
    h = jnp.tanh(
        jnp.dot(w2, h, preferred_element_type=jnp.float32) + b2_col
    )                                        # (H, TN)

    # layer 3: N=1 output -> VPU multiply + cross-sublane (XLU) reduce; keeps
    # the result lane-dense.  b3 comes in as an SMEM scalar.
    out = jnp.sum(w3_col * h, axis=0, keepdims=True) + b3_ref[0, 0]   # (1, TN)
    o_ref[...] = out.astype(o_ref.dtype)


@functools.partial(jax.jit, static_argnames=("tile_n",))
def ode_net_forward(x, w1, b1, w2, b2, w3, b3, *, tile_n=512):
    """Forward pass of ODE_Net.  x: (N, 1); params in PyTorch (out, in) layout.

    tile_n: lane-dense batch tile.  Keep it a multiple of 128 and <= ~1024 in
    f32 so the two live (H, tile_n) activation copies stay inside the 64-vreg
    file (no spills).
    """
    n = x.shape[0]
    h = w2.shape[0]
    assert tile_n % 128 == 0, "tile_n must be lane-aligned (multiple of 128)"

    # Pad the batch up to a multiple of tile_n (each point is independent, so
    # zero-padding is harmless); slice the padding back off at the end.
    n_tiles = pl.cdiv(n, tile_n)
    n_pad = n_tiles * tile_n

    x_row = x.reshape(1, n).astype(jnp.float32)
    if n_pad != n:
        x_row = jnp.pad(x_row, ((0, 0), (0, n_pad - n)))

    # W2 as a clean (H, H) MXU tile; small column params packed in one (H, 4)
    # slab: [ w1 | b1 | b2 | w3^T ].  b3 scalar rides in SMEM.
    w2_f32 = w2.astype(jnp.float32)
    cols = jnp.concatenate(
        [
            w1.reshape(h, 1).astype(jnp.float32),
            b1.reshape(h, 1).astype(jnp.float32),
            b2.reshape(h, 1).astype(jnp.float32),
            w3.reshape(h, 1).astype(jnp.float32),
        ],
        axis=1,
    )
    b3_arr = b3.reshape(1, 1).astype(jnp.float32)

    grid = (n_tiles,)  # keep >= 2 steps at realistic N so v7x's 2 TCs both get work

    out_row = pl.pallas_call(
        _ode_net_kernel,
        out_shape=jax.ShapeDtypeStruct((1, n_pad), jnp.float32),
        grid_spec=pltpu.PrefetchScalarGridSpec(
            num_scalar_prefetch=0,
            grid=grid,
            in_specs=[
                pl.BlockSpec((1, tile_n), lambda i: (0, i)),        # x tile (lane-dense)
                pl.BlockSpec((h, h), lambda i: (0, 0)),             # W2 (resident)
                pl.BlockSpec((h, 4), lambda i: (0, 0)),             # column params (resident)
                pl.BlockSpec(memory_space=pltpu.MemorySpace.SMEM),  # b3 scalar
            ],
            out_specs=pl.BlockSpec((1, tile_n), lambda i: (0, i)),  # lane-dense output
        ),
        compiler_params=pltpu.CompilerParams(
            dimension_semantics=("parallel",),
        ),
    )(x_row, w2_f32, cols, b3_arr)

    return out_row[:, :n].reshape(n, 1)


def init_params(key, hidden_units=32):
    """nn.Linear-style init U(-1/sqrt(fan_in), 1/sqrt(fan_in)), PyTorch (out,in) layout."""
    ks = jax.random.split(key, 6)

    def lin(kw, kb, fan_in, fan_out):
        bound = 1.0 / jnp.sqrt(jnp.float32(fan_in))
        w = jax.random.uniform(kw, (fan_out, fan_in), jnp.float32, -bound, bound)
        b = jax.random.uniform(kb, (fan_out,), jnp.float32, -bound, bound)
        return w, b

    w1, b1 = lin(ks[0], ks[1], 1, hidden_units)
    w2, b2 = lin(ks[2], ks[3], hidden_units, hidden_units)
    w3, b3 = lin(ks[4], ks[5], hidden_units, 1)
    return w1, b1, w2, b2, w3, b3


def reference_forward(x, w1, b1, w2, b2, w3, b3):
    h = jnp.tanh(x @ w1.T + b1)
    h = jnp.tanh(h @ w2.T + b2)
    return h @ w3.T + b3


if __name__ == "__main__":
    key = jax.random.PRNGKey(0)
    k_x, k_p = jax.random.split(key)

    hidden_units = 32   # module default is 20; 32 keeps the (H, TN) blocks sublane-friendly
    n = 1000            # collocation points; NOT a multiple of tile_n -> exercises padding
    tile_n = 512        # lane-dense batch tile -> 2 grid steps (both v7x TCs get work)

    x = jax.random.uniform(k_x, (n, 1), jnp.float32, 0.0, 1.0)
    params = init_params(k_p, hidden_units)

    out = ode_net_forward(x, *params, tile_n=tile_n)
    out = jax.block_until_ready(out)

    ref = reference_forward(x, *params)
    assert out.shape == (n, 1)
    assert jnp.allclose(out, ref, atol=1e-5, rtol=1e-5)

    print("KERNEL_OK")
</pallas_src>

<mosaic_0001>
module attributes {stable_mosaic.version = 11 : i64} {
  func.func @_ode_net_kernel(%arg0: i32, %arg1: memref<1x512xf32, #tpu.memory_space<vmem>>, %arg2: memref<32x32xf32, #tpu.memory_space<vmem>>, %arg3: memref<32x4xf32, #tpu.memory_space<vmem>>, %arg4: memref<1x1xf32, #tpu.memory_space<smem>>, %arg5: memref<1x512xf32, #tpu.memory_space<vmem>>) attributes {dimension_semantics = [#tpu.dimension_semantics<parallel>], iteration_bounds = array<i64: 2>, scalar_prefetch = 0 : i64, scratch_operands = 0 : i64, tpu.core_type = #tpu.core_type<tc>, window_params = [{transform_indices = @transform_0, window_bounds = array<i64: 1, 512>}, {pipeline_mode = #tpu.pipeline_mode<synchronous>, transform_indices = @transform_1, window_bounds = array<i64: 32, 32>}, {pipeline_mode = #tpu.pipeline_mode<synchronous>, transform_indices = @transform_2, window_bounds = array<i64: 32, 4>}, {transform_indices = @transform_3, window_bounds = array<i64: 1, 1>}, {transform_indices = @transform_4, window_bounds = array<i64: 1, 512>}]} {
    %c0 = arith.constant 0 : index
    %c0_0 = arith.constant 0 : index
    %0 = vector.load %arg1[%c0, %c0_0] : memref<1x512xf32, #tpu.memory_space<vmem>>, vector<1x512xf32>
    %c0_1 = arith.constant 0 : index
    %c0_2 = arith.constant 0 : index
    %1 = vector.load %arg2[%c0_1, %c0_2] : memref<32x32xf32, #tpu.memory_space<vmem>>, vector<32x32xf32>
    %c0_3 = arith.constant 0 : index
    %c0_4 = arith.constant 0 : index
    %2 = vector.load %arg3[%c0_3, %c0_4] : memref<32x4xf32, #tpu.memory_space<vmem>>, vector<32x4xf32>
    %3 = vector.extract_strided_slice %2 {offsets = [0, 0], sizes = [32, 1], strides = [1, 1]} : vector<32x4xf32> to vector<32x1xf32>
    %4 = vector.extract_strided_slice %2 {offsets = [0, 1], sizes = [32, 1], strides = [1, 1]} : vector<32x4xf32> to vector<32x1xf32>
    %5 = vector.extract_strided_slice %2 {offsets = [0, 2], sizes = [32, 1], strides = [1, 1]} : vector<32x4xf32> to vector<32x1xf32>
    %6 = vector.extract_strided_slice %2 {offsets = [0, 3], sizes = [32, 1], strides = [1, 1]} : vector<32x4xf32> to vector<32x1xf32>
    %7 = vector.broadcast %3 : vector<32x1xf32> to vector<32x512xf32>
    %8 = vector.broadcast %0 : vector<1x512xf32> to vector<32x512xf32>
    %9 = arith.mulf %7, %8 : vector<32x512xf32>
    %10 = vector.broadcast %4 : vector<32x1xf32> to vector<32x512xf32>
    %11 = arith.addf %9, %10 : vector<32x512xf32>
    %12 = math.tanh %11 : vector<32x512xf32>
    %cst = arith.constant dense<0.000000e+00> : vector<32x512xf32>
    %13 = tpu.matmul %1, %12, %cst {dimension_numbers = #tpu.dot_dimension_numbers<[1], [0], [0], [1], [0, 0, 1, 1], [], []>} : vector<32x32xf32>, vector<32x512xf32>, vector<32x512xf32> -> vector<32x512xf32>
    %14 = vector.broadcast %5 : vector<32x1xf32> to vector<32x512xf32>
    %15 = arith.addf %13, %14 : vector<32x512xf32>
    %16 = math.tanh %15 : vector<32x512xf32>
    %17 = vector.broadcast %6 : vector<32x1xf32> to vector<32x512xf32>
    %18 = arith.mulf %17, %16 : vector<32x512xf32>
    %cst_5 = arith.constant dense<0.000000e+00> : vector<512xf32>
    %19 = vector.multi_reduction <add>, %18, %cst_5 [0] : vector<32x512xf32> to vector<512xf32>
    %20 = vector.shape_cast %19 : vector<512xf32> to vector<1x512xf32>
    %c0_6 = arith.constant 0 : index
    %c0_7 = arith.constant 0 : index
    %21 = memref.load %arg4[%c0_6, %c0_7] : memref<1x1xf32, #tpu.memory_space<smem>>
    %22 = vector.broadcast %21 : f32 to vector<1x512xf32>
    %23 = arith.addf %20, %22 : vector<1x512xf32>
    %c0_8 = arith.constant 0 : index
    %c0_9 = arith.constant 0 : index
    %24 = vector.load %arg5[%c0_8, %c0_9] : memref<1x512xf32, #tpu.memory_space<vmem>>, vector<1x512xf32>
    tpu.vector_store %arg5[%c0_8, %c0_9], %23 {strides = array<i32>} : memref<1x512xf32, #tpu.memory_space<vmem>>, vector<1x512xf32>,
    return
  }
  func.func @transform_0(%arg0: i32) -> (i32, i32) {
    %c0_i32 = arith.constant 0 : i32
    %c0_i32_0 = arith.constant 0 : i32
    return %c0_i32, %arg0 : i32, i32
  }
  func.func @transform_1(%arg0: i32) -> (i32, i32) {
    %c0_i32 = arith.constant 0 : i32
    %c0_i32_0 = arith.constant 0 : i32
    %c0_i32_1 = arith.constant 0 : i32
    return %c0_i32, %c0_i32_0 : i32, i32
  }
  func.func @transform_2(%arg0: i32) -> (i32, i32) {
    %c0_i32 = arith.constant 0 : i32
    %c0_i32_0 = arith.constant 0 : i32
    %c0_i32_1 = arith.constant 0 : i32
    return %c0_i32, %c0_i32_0 : i32, i32
  }
  func.func @transform_3(%arg0: i32) -> (i32, i32) {
    %c0_i32 = arith.constant 0 : i32
    %c0_i32_0 = arith.constant 0 : i32
    %c0_i32_1 = arith.constant 0 : i32
    return %c0_i32, %c0_i32_0 : i32, i32
  }
  func.func @transform_4(%arg0: i32) -> (i32, i32) {
    %c0_i32 = arith.constant 0 : i32
    %c0_i32_0 = arith.constant 0 : i32
    return %c0_i32, %arg0 : i32, i32
  }
}

</mosaic_0001>

<llo_original>
// kernel: ode_net_forward.1
$region0: #{ode_net_forward.1}
  #allocation0 [shape = 'u32[]', space=smem, size = 0x4, offset = 0x4, fixed_abs, tag = 'smem constant byte address 0x4 - core index']
  #allocation1 [shape = 'u32[144,128]{1,0:T(1,128)}', space=vmem, size = 0x12000, scoped, tag = 'internal scratch']
  #allocation2 [shape = 'f32[1,1]{1,0:T(1,128)S(6)}', space=smem, size = 0x200, scoped, tag = 'scoped memory for ode_net_forward.1']
  %s0 = inlined_call_operand.vmem [shape: f32[1,1024], index: 0, kind: input, shape index: {}]
  %s1 = inlined_call_operand.vmem [shape: f32[32,32], index: 1, kind: input, shape index: {}]
  %s2 = inlined_call_operand.vmem [shape: f32[32,4], index: 2, kind: input, shape index: {}]
  %s3 = inlined_call_operand.<no memory space> [shape: f32[1,1], index: 3, kind: input, shape index: {}]
  %s4 = inlined_call_operand.vmem [shape: f32[1,1024], index: 4, kind: output, shape index: {}]
  %s5 = sld [smem:[#allocation0]]
  $region49: #{ode_net_forward.1} parent=0
    _
  %s7 = ssub.s32 1, %s5
  %s8 = scalar_select 0, %s7, %s5
  %9 = sst [smem:[#allocation2]] %s3
  loop: start=0, step=1, limit=4
  $region2: #{ode_net_forward.1} parent=0 // loop_pre_header
    _
  $region3: #{ode_net_forward.1} parent=0 // loop_header
    %s11 = sphi 0, %s15
    %p12 = scmp.ge.s32.totalorder %s11, 4
    %s21 = sphi 0, %s23
    %s24 = sphi 0, %s21
    %s25 = sphi 0, %s24
    %s41 = sphi 0, %s25
    %s45 = sphi 0, %s45
    %s47 = sphi 0, %s45
    %s48 = sphi 0, %s47
    %s62 = sphi 0, %s48
    %s66 = sphi 0, %s66
    %s68 = sphi 0, %s66
    %s69 = sphi 0, %s68
    %s83 = sphi 0, %s69
    %s87 = sphi 0, %s87
    %s89 = sphi 0, %s87
    %s90 = sphi 0, %s89
    %s104 = sphi 0, %s90
    %s110 = sphi 0, %s112
    %s113 = sphi 0, %s110
    %s114 = sphi 0, %s113
    %s130 = sphi 0, %s114
  $region4: #{ode_net_forward.1} parent=0 // loop_header_branch
    %14 = sbr.rel (%p12) target = $region8
  $region5: #{ode_net_forward.1} parent=0 // loop_body
    %s16 = ssub.s32 %s11, 1
    %s17 = ssub.s32 %s11, 2
    %s18 = sadd.s32 %s11, 1
    %s19 = ssub.s32 %s11, %s18
    %p20 = scmp.eq.s32.totalorder %s19, 0
    %s22 = sadd.s32 %s21, 1
    %s23 = scalar_select %p20, %s21, %s22
    %p26 = pneg %p20
    %p27 = scmp.eq.s32.totalorder %s11, 1
    %p28 = por %p26, %p27
    %p29 = scmp.ne.s32.totalorder %s21, %s24
    %p30 = scmp.eq.s32.totalorder %s11, 0
    %p31 = por %p29, %p30
    %p32 = scmp.ne.s32.totalorder %s21, %s24
    %p33 = scmp.eq.s32.totalorder %s16, 1
    %p34 = por %p32, %p33
    %p35 = scmp.ne.s32.totalorder %s24, %s25
    %p36 = scmp.eq.s32.totalorder %s16, 0
    %p37 = por %p35, %p36
    %p38 = scmp.ne.s32.totalorder %s24, %s25
    %p39 = scmp.eq.s32.totalorder %s17, 1
    %p40 = por %p38, %p39
    %p42 = scmp.ne.s32.totalorder %s25, %s41
    %p43 = scmp.eq.s32.totalorder %s17, 0
    %p44 = por %p42, %p43
    %s46 = sadd.s32 %s45, 1
    %p49 = scmp.eq.s32.totalorder %s11, 1
    %p50 = scmp.ne.s32.totalorder %s45, %s47
    %p51 = scmp.eq.s32.totalorder %s11, 0
    %p52 = por %p50, %p51
    %p53 = scmp.ne.s32.totalorder %s45, %s47
    %p54 = scmp.eq.s32.totalorder %s16, 1
    %p55 = por %p53, %p54
    %p56 = scmp.ne.s32.totalorder %s47, %s48
    %p57 = scmp.eq.s32.totalorder %s16, 0
    %p58 = por %p56, %p57
    %p59 = scmp.ne.s32.totalorder %s47, %s48
    %p60 = scmp.eq.s32.totalorder %s17, 1
    %p61 = por %p59, %p60
    %p63 = scmp.ne.s32.totalorder %s48, %s62
    %p64 = scmp.eq.s32.totalorder %s17, 0
    %p65 = por %p63, %p64
    %s67 = sadd.s32 %s66, 1
    %p70 = scmp.eq.s32.totalorder %s11, 1
    %p71 = scmp.ne.s32.totalorder %s66, %s68
    %p72 = scmp.eq.s32.totalorder %s11, 0
    %p73 = por %p71, %p72
    %p74 = scmp.ne.s32.totalorder %s66, %s68
    %p75 = scmp.eq.s32.totalorder %s16, 1
    %p76 = por %p74, %p75
    %p77 = scmp.ne.s32.totalorder %s68, %s69
    %p78 = scmp.eq.s32.totalorder %s16, 0
    %p79 = por %p77, %p78
    %p80 = scmp.ne.s32.totalorder %s68, %s69
    %p81 = scmp.eq.s32.totalorder %s17, 1
    %p82 = por %p80, %p81
    %p84 = scmp.ne.s32.totalorder %s69, %s83
    %p85 = scmp.eq.s32.totalorder %s17, 0
    %p86 = por %p84, %p85
    %s88 = sadd.s32 %s87, 1
    %p91 = scmp.eq.s32.totalorder %s11, 1
    %p92 = scmp.ne.s32.totalorder %s87, %s89
    %p93 = scmp.eq.s32.totalorder %s11, 0
    %p94 = por %p92, %p93
    %p95 = scmp.ne.s32.totalorder %s87, %s89
    %p96 = scmp.eq.s32.totalorder %s16, 1
    %p97 = por %p95, %p96
    %p98 = scmp.ne.s32.totalorder %s89, %s90
    %p99 = scmp.eq.s32.totalorder %s16, 0
    %p100 = por %p98, %p99
    %p101 = scmp.ne.s32.totalorder %s89, %s90
    %p102 = scmp.eq.s32.totalorder %s17, 1
    %p103 = por %p101, %p102
    %p105 = scmp.ne.s32.totalorder %s90, %s104
    %p106 = scmp.eq.s32.totalorder %s17, 0
    %p107 = por %p105, %p106
    %s108 = ssub.s32 %s11, %s18
    %p109 = scmp.eq.s32.totalorder %s108, 0
    %s111 = sadd.s32 %s110, 1
    %s112 = scalar_select %p109, %s110, %s111
    %p115 = pneg %p109
    %p116 = scmp.eq.s32.totalorder %s11, 1
    %p117 = por %p115, %p116
    %p118 = scmp.ne.s32.totalorder %s110, %s113
    %p119 = scmp.eq.s32.totalorder %s11, 0
    %p120 = por %p118, %p119
    %p121 = scmp.ne.s32.totalorder %s110, %s113
    %p122 = scmp.eq.s32.totalorder %s16, 1
    %p123 = por %p121, %p122
    %p124 = scmp.ne.s32.totalorder %s113, %s114
    %p125 = scmp.eq.s32.totalorder %s16, 0
    %p126 = por %p124, %p125
    %p127 = scmp.ne.s32.totalorder %s113, %s114
    %p128 = scmp.eq.s32.totalorder %s17, 1
    %p129 = por %p127, %p128
    %p131 = scmp.ne.s32.totalorder %s114, %s130
    %p132 = scmp.eq.s32.totalorder %s17, 0
    %p133 = por %p131, %p132
    %p134 = scmp.le.s32.totalorder 1, %s11
    %p135 = scmp.lt.s32.totalorder %s11, 3
    %p136 = pnand %p134, %p135
    %p137 = pneg %p136
    // Predicated region
    $region9: #{ode_net_forward.1} parent=5 // pred_check
      _
    $region10: #{ode_net_forward.1} parent=5 // pred_check_branch
      %139 = sbr.rel (%p136) target = $region12
    $region11: #{ode_net_forward.1} parent=5 // pred_region
      %s140 = ssub.s32 %s11, 1
      // Predicated region
      $region13: #{ode_net_forward.1} parent=11 // pred_check
        %p141 = pneg %p58
      $region14: #{ode_net_forward.1} parent=11 // pred_check_branch
        %143 = sbr.rel (%p141) target = $region16
      $region15: #{ode_net_forward.1} parent=11 // pred_region
        _
      $region16: #{ode_net_forward.1} parent=11 // pred_fallthru
        _
      // Predicated region
      $region17: #{ode_net_forward.1} parent=11 // pred_check
        %p144 = pneg %p79
      $region18: #{ode_net_forward.1} parent=11 // pred_check_branch
        %146 = sbr.rel (%p144) target = $region20
      $region19: #{ode_net_forward.1} parent=11 // pred_region
        _
      $region20: #{ode_net_forward.1} parent=11 // pred_fallthru
        _
      // Predicated region
      $region21: #{ode_net_forward.1} parent=11 // pred_check
        %p147 = pneg %p100
      $region22: #{ode_net_forward.1} parent=11 // pred_check_branch
        %149 = sbr.rel (%p147) target = $region24
      $region23: #{ode_net_forward.1} parent=11 // pred_region
        _
      $region24: #{ode_net_forward.1} parent=11 // pred_fallthru
        _
    $region12: #{ode_net_forward.1} parent=5 // pred_fallthru
      _
    %p150 = scmp.lt.s32.totalorder %s11, 2
    // Predicated region
    $region25: #{ode_net_forward.1} parent=5 // pred_check
      %p151 = pneg %p150
    $region26: #{ode_net_forward.1} parent=5 // pred_check_branch
      %153 = sbr.rel (%p151) target = $region28
    $region27: #{ode_net_forward.1} parent=5 // pred_region
      // Predicated region
      $region29: #{ode_net_forward.1} parent=27 // pred_check
        %p154 = pneg %p31
      $region30: #{ode_net_forward.1} parent=27 // pred_check_branch
        %156 = sbr.rel (%p154) target = $region32
      $region31: #{ode_net_forward.1} parent=27 // pred_region
        %s157 = smul.u32 4, %s11
        %p158 = scmp.lt.s32.totalorder %s157, 7
        %s159 = scalar_select %p158, %s157, 7
        %s160 = scalar_lea.vmem %s0, %s159
        %s161 = smul.u32 4, %s11
      $region32: #{ode_net_forward.1} parent=27 // pred_fallthru
        _
    $region28: #{ode_net_forward.1} parent=5 // pred_fallthru
      _
    %p162 = scmp.le.s32.totalorder 1, %s11
    %p163 = scmp.lt.s32.totalorder %s11, 3
    %p164 = pnand %p162, %p163
    %p165 = pneg %p164
    // Predicated region
    $region33: #{ode_net_forward.1} parent=5 // pred_check
      _
    $region34: #{ode_net_forward.1} parent=5 // pred_check_branch
      %167 = sbr.rel (%p164) target = $region36
    $region35: #{ode_net_forward.1} parent=5 // pred_region
      %s168 = ssub.s32 %s11, 1
      %s169 = smul.u32 4, %s16
      %p170 = scmp.lt.s32.totalorder %s169, 7
      %s171 = scalar_select %p170, %s169, 7
      %s172 = scalar_lea.vmem %s0, %s171
      %p173 = pneg %p37
      %p174 = pneg %p34
      %p175 = pneg %p58
      %p176 = pneg %p55
      %p177 = pneg %p79
      %p178 = pneg %p76
      %p179 = pneg %p100
      %p180 = pneg %p97
      %p181 = pneg %p126
      %p182 = pneg %p123
      %s183 = smul.u32 4, %s16
      %p184 = scmp.lt.s32.totalorder %s183, 7
      %s185 = scalar_select %p184, %s183, 7
      %s186 = scalar_lea.vmem %s4, %s185
      %s187 = smul.u32 4, %s16
      %p188 = scmp.lt.s32.totalorder %s187, 7
      %s189 = scalar_select %p188, %s187, 7
      %s190 = scalar_lea.vmem %s0, %s189
      %s191 = smul.u32 4, %s16
      %s192 = smul.u32 4, %s16
      %p193 = scmp.lt.s32.totalorder %s192, 7
      %s194 = scalar_select %p193, %s192, 7
      %s195 = scalar_lea.vmem %s4, %s194
      %s196 = smul.u32 4, %s16
      %v197 = vld [vmem:[%s190] sm:$0xf]
      %v198 = vld [vmem:[%s1] sm:$0xff]
      %v199 = vld [vmem:[%s1 + $0x8] sm:$0xff]
      %v200 = vld [vmem:[%s1 + $0x10] sm:$0xff]
      %v201 = vld [vmem:[%s1 + $0x18] sm:$0xff]
      %v202 = vld [vmem:[%s2] sm:$0xff]
      %v203 = vld [vmem:[%s2 + $0x8] sm:$0xff]
      %v204 = vld [vmem:[%s2 + $0x10] sm:$0xff]
      %v205 = vld [vmem:[%s2 + $0x18] sm:$0xff]
      %207 = vset.pattern.permute.xlu0 0
      %208 = vperm.xlu0 %207, %v202
      %v209 = vpop.permute.xlu0 %208
      %212 = vset.pattern.permute.xlu0 0
      %213 = vperm.xlu0 %212, %v203
      %v214 = vpop.permute.xlu0 %213
      %217 = vset.pattern.permute.xlu0 0
      %218 = vperm.xlu0 %217, %v204
      %v219 = vpop.permute.xlu0 %218
      %222 = vset.pattern.permute.xlu0 0
      %223 = vperm.xlu0 %222, %v205
      %v224 = vpop.permute.xlu0 %223
      %v227 = vlaneseq
      %v228 = vshrl.u32 %v227, 7
      %v229 = vsub.s32 0, %v228
      %v230 = vrot.slane %v197, %v229
      %v231 = vlaneseq
      %v232 = vshrl.u32 %v231, 7
      %v233 = vsub.s32 1, %v232
      %v234 = vrot.slane %v197, %v233
      %v235 = vlaneseq
      %v236 = vshrl.u32 %v235, 7
      %v237 = vsub.s32 2, %v236
      %v238 = vrot.slane %v197, %v237
      %v239 = vlaneseq
      %v240 = vshrl.u32 %v239, 7
      %v241 = vsub.s32 3, %v240
      %v242 = vrot.slane %v197, %v241
      %v247 = vmul.f32 %v209, %v230
      %v248 = vmul.f32 %v209, %v234
      %v249 = vmul.f32 %v209, %v238
      %v250 = vmul.f32 %v209, %v242
      %v251 = vmul.f32 %v214, %v230
      %v252 = vmul.f32 %v214, %v234
      %v253 = vmul.f32 %v214, %v238
      %v254 = vmul.f32 %v214, %v242
      %v255 = vmul.f32 %v219, %v230
      %v256 = vmul.f32 %v219, %v234
      %v257 = vmul.f32 %v219, %v238
      %v258 = vmul.f32 %v219, %v242
      %v259 = vmul.f32 %v224, %v230
      %v260 = vmul.f32 %v224, %v234
      %v261 = vmul.f32 %v224, %v238
      %v262 = vmul.f32 %v224, %v242
      %263 = vset.pattern.permute.xlu0 1
      %264 = vperm.xlu0 %263, %v202
      %v265 = vpop.permute.xlu0 %264
      %267 = vset.pattern.permute.xlu0 1
      %268 = vperm.xlu0 %267, %v203
      %v269 = vpop.permute.xlu0 %268
      %271 = vset.pattern.permute.xlu0 1
      %272 = vperm.xlu0 %271, %v204
      %v273 = vpop.permute.xlu0 %272
      %275 = vset.pattern.permute.xlu0 1
      %276 = vperm.xlu0 %275, %v205
      %v277 = vpop.permute.xlu0 %276
      %v279 = vadd.f32 %v247, %v265
      %v280 = vadd.f32 %v248, %v265
      %v281 = vadd.f32 %v249, %v265
      %v282 = vadd.f32 %v250, %v265
      %v283 = vadd.f32 %v251, %v269
      %v284 = vadd.f32 %v252, %v269
      %v285 = vadd.f32 %v253, %v269
      %v286 = vadd.f32 %v254, %v269
      %v287 = vadd.f32 %v255, %v273
      %v288 = vadd.f32 %v256, %v273
      %v289 = vadd.f32 %v257, %v273
      %v290 = vadd.f32 %v258, %v273
      %v291 = vadd.f32 %v259, %v277
      %v292 = vadd.f32 %v260, %v277
      %v293 = vadd.f32 %v261, %v277
      %v294 = vadd.f32 %v262, %v277
      %v295 = vtanh.pop %v279
      %v296 = vtanh.pop %v280
      %v297 = vtanh.pop %v281
      %v298 = vtanh.pop %v282
      %v299 = vtanh.pop %v283
      %v300 = vtanh.pop %v284
      %v301 = vtanh.pop %v285
      %v302 = vtanh.pop %v286
      %v303 = vtanh.pop %v287
      %v304 = vtanh.pop %v288
      %v305 = vtanh.pop %v289
      %v306 = vtanh.pop %v290
      %v307 = vtanh.pop %v291
      %v308 = vtanh.pop %v292
      %v309 = vtanh.pop %v293
      %v310 = vtanh.pop %v294
      %311 = vset.pattern.permute.xlu0 2
      %312 = vperm.xlu0 %311, %v202
      %v313 = vpop.permute.xlu0 %312
      %315 = vset.pattern.permute.xlu0 2
      %316 = vperm.xlu0 %315, %v203
      %v317 = vpop.permute.xlu0 %316
      %319 = vset.pattern.permute.xlu0 2
      %320 = vperm.xlu0 %319, %v204
      %v321 = vpop.permute.xlu0 %320
      %323 = vset.pattern.permute.xlu0 2
      %324 = vperm.xlu0 %323, %v205
      %v325 = vpop.permute.xlu0 %324
      %vm327 = vcmask 261120
      %v329 = vsel %vm327, %v198, 0
      %v332 = vsel %vm327, %v199, 0
      %v335 = vsel %vm327, %v200, 0
      %v338 = vsel %vm327, %v201, 0
      %340 = vmatprep.subr.mxu0 0.0
      %341 = vmatpush1.msra.mxu0 0.0
      %342 = vmatprep.subr.mxu0 0.0
      %343 = vmatpush1.msra.mxu0 0.0
      %344 = vmatprep.subr.mxu0 0.0
      %345 = vmatpush1.msra.mxu0 0.0
      %346 = vmatprep.subr.mxu0 0.0
      %347 = vmatpush1.msra.mxu0 0.0
      %348 = vmatprep.subr.mxu0 0.0
      %349 = vmatpush1.msra.mxu0 0.0
      %350 = vmatprep.subr.mxu0 0.0
      %351 = vmatpush1.msra.mxu0 0.0
      %352 = vmatprep.subr.mxu0 0.0
      %353 = vmatpush1.msra.mxu0 0.0
      %354 = vmatprep.subr.mxu0 0.0
      %355 = vmatpush1.msra.mxu0 0.0
      %356 = vmatprep.subr.mxu0 0.0
      %357 = vmatpush1.msra.mxu0 0.0
      %358 = vmatprep.subr.mxu0 0.0
      %359 = vmatpush1.msra.mxu0 0.0
      %360 = vmatprep.subr.mxu0 0.0
      %361 = vmatpush1.msra.mxu0 0.0
      %362 = vmatprep.subr.mxu0 0.0
      %363 = vmatpush1.msra.mxu0 0.0
      %364 = vmatprep.subr.mxu0 %v308
      %365 = vmatpush1.msra.mxu0 %v307
      %366 = vmatprep.subr.mxu0 %v304
      %367 = vmatpush1.msra.mxu0 %v303
      %368 = vmatprep.subr.mxu0 %v300
      %369 = vmatpush1.msra.mxu0 %v299
      %370 = vmatprep.subr.mxu0 %v296
      %371 = vmatpush1.msra.mxu0 %v295
      %372 = vmatprep.subr.mxu0 0.0
      %373 = vmatpush2.msra.mxu0 0.0
      %374 = vmatprep.subr.mxu0 0.0
      %375 = vmatpush2.msra.mxu0 0.0
      %376 = vmatprep.subr.mxu0 0.0
      %377 = vmatpush2.msra.mxu0 0.0
      %378 = vmatprep.subr.mxu0 0.0
      %379 = vmatpush2.msra.mxu0 0.0
      %380 = vmatprep.subr.mxu0 0.0
      %381 = vmatpush2.msra.mxu0 0.0
      %382 = vmatprep.subr.mxu0 0.0
      %383 = vmatpush2.msra.mxu0 0.0
      %384 = vmatprep.subr.mxu0 0.0
      %385 = vmatpush2.msra.mxu0 0.0
      %386 = vmatprep.subr.mxu0 0.0
      %387 = vmatpush2.msra.mxu0 0.0
      %388 = vmatprep.subr.mxu0 0.0
      %389 = vmatpush2.msra.mxu0 0.0
      %390 = vmatprep.subr.mxu0 0.0
      %391 = vmatpush2.msra.mxu0 0.0
      %392 = vmatprep.subr.mxu0 0.0
      %393 = vmatpush2.msra.mxu0 0.0
      %394 = vmatprep.subr.mxu0 0.0
      %395 = vmatpush2.msra.mxu0 0.0
      %396 = vmatprep.subr.mxu0 0.0
      %397 = vmatpush2.msra.mxu0 0.0
      %398 = vmatprep.subr.mxu0 0.0
      %399 = vmatpush2.msra.mxu0 0.0
      %400 = vmatprep.subr.mxu0 0.0
      %401 = vmatpush2.msra.mxu0 0.0
      %402 = vmatprep.subr.mxu0 0.0
      %403 = vmatpush2.msra.mxu0 0.0
      %404 = vmatprep.mubr.f32.mxu0 0.0
      %405 = vmatmul.mubr.f32.gmra.mxu0 %v329
      %v406 = vpop.f32.mrf.mxu0
      %v407 = vadd.f32 %v313, %v406
      %v408 = vpop.f32.mrf.mxu0
      %v409 = vadd.f32 %v313, %v408
      %410 = vmatprep.mubr.f32.mxu0 0.0
      %411 = vmatmul.mubr.f32.gmra.mxu0 %v332
      %v412 = vpop.f32.mrf.mxu0
      %v413 = vadd.f32 %v317, %v412
      %v414 = vpop.f32.mrf.mxu0
      %v415 = vadd.f32 %v317, %v414
      %416 = vmatprep.mubr.f32.mxu0 0.0
      %417 = vmatmul.mubr.f32.gmra.mxu0 %v335
      %v418 = vpop.f32.mrf.mxu0
      %v419 = vadd.f32 %v321, %v418
      %v420 = vpop.f32.mrf.mxu0
      %v421 = vadd.f32 %v321, %v420
      %422 = vmatprep.mubr.f32.mxu0 0.0
      %423 = vmatmul.mubr.f32.gmra.mxu0 %v338
      %v424 = vpop.f32.mrf.mxu0
      %v425 = vadd.f32 %v325, %v424
      %v426 = vpop.f32.mrf.mxu0
      %v427 = vadd.f32 %v325, %v426
      %428 = vdwg.mxu0
      %429 = vmatprep.subr.mxu0 0.0
      %430 = vmatpush1.msra.mxu0 0.0
      %431 = vmatprep.subr.mxu0 0.0
      %432 = vmatpush1.msra.mxu0 0.0
      %433 = vmatprep.subr.mxu0 0.0
      %434 = vmatpush1.msra.mxu0 0.0
      %435 = vmatprep.subr.mxu0 0.0
      %436 = vmatpush1.msra.mxu0 0.0
      %437 = vmatprep.subr.mxu0 0.0
      %438 = vmatpush1.msra.mxu0 0.0
      %439 = vmatprep.subr.mxu0 0.0
      %440 = vmatpush1.msra.mxu0 0.0
      %441 = vmatprep.subr.mxu0 0.0
      %442 = vmatpush1.msra.mxu0 0.0
      %443 = vmatprep.subr.mxu0 0.0
      %444 = vmatpush1.msra.mxu0 0.0
      %445 = vmatprep.subr.mxu0 0.0
      %446 = vmatpush1.msra.mxu0 0.0
      %447 = vmatprep.subr.mxu0 0.0
      %448 = vmatpush1.msra.mxu0 0.0
      %449 = vmatprep.subr.mxu0 0.0
      %450 = vmatpush1.msra.mxu0 0.0
      %451 = vmatprep.subr.mxu0 0.0
      %452 = vmatpush1.msra.mxu0 0.0
      %453 = vmatprep.subr.mxu0 %v310
      %454 = vmatpush1.msra.mxu0 %v309
      %455 = vmatprep.subr.mxu0 %v306
      %456 = vmatpush1.msra.mxu0 %v305
      %457 = vmatprep.subr.mxu0 %v302
      %458 = vmatpush1.msra.mxu0 %v301
      %459 = vmatprep.subr.mxu0 %v298
      %460 = vmatpush1.msra.mxu0 %v297
      %461 = vmatprep.subr.mxu0 0.0
      %462 = vmatpush2.msra.mxu0 0.0
      %463 = vmatprep.subr.mxu0 0.0
      %464 = vmatpush2.msra.mxu0 0.0
      %465 = vmatprep.subr.mxu0 0.0
      %466 = vmatpush2.msra.mxu0 0.0
      %467 = vmatprep.subr.mxu0 0.0
      %468 = vmatpush2.msra.mxu0 0.0
      %469 = vmatprep.subr.mxu0 0.0
      %470 = vmatpush2.msra.mxu0 0.0
      %471 = vmatprep.subr.mxu0 0.0
      %472 = vmatpush2.msra.mxu0 0.0
      %473 = vmatprep.subr.mxu0 0.0
      %474 = vmatpush2.msra.mxu0 0.0
      %475 = vmatprep.subr.mxu0 0.0
      %476 = vmatpush2.msra.mxu0 0.0
      %477 = vmatprep.subr.mxu0 0.0
      %478 = vmatpush2.msra.mxu0 0.0
      %479 = vmatprep.subr.mxu0 0.0
      %480 = vmatpush2.msra.mxu0 0.0
      %481 = vmatprep.subr.mxu0 0.0
      %482 = vmatpush2.msra.mxu0 0.0
      %483 = vmatprep.subr.mxu0 0.0
      %484 = vmatpush2.msra.mxu0 0.0
      %485 = vmatprep.subr.mxu0 0.0
      %486 = vmatpush2.msra.mxu0 0.0
      %487 = vmatprep.subr.mxu0 0.0
      %488 = vmatpush2.msra.mxu0 0.0
      %489 = vmatprep.subr.mxu0 0.0
      %490 = vmatpush2.msra.mxu0 0.0
      %491 = vmatprep.subr.mxu0 0.0
      %492 = vmatpush2.msra.mxu0 0.0
      %493 = vmatprep.mubr.f32.mxu0 0.0
      %494 = vmatmul.mubr.f32.gmra.mxu0 %v329
      %v495 = vpop.f32.mrf.mxu0
      %v496 = vadd.f32 %v313, %v495
      %v497 = vpop.f32.mrf.mxu0
      %v498 = vadd.f32 %v313, %v497
      %499 = vmatprep.mubr.f32.mxu0 0.0
      %500 = vmatmul.mubr.f32.gmra.mxu0 %v332
      %v501 = vpop.f32.mrf.mxu0
      %v502 = vadd.f32 %v317, %v501
      %v503 = vpop.f32.mrf.mxu0
      %v504 = vadd.f32 %v317, %v503
      %505 = vmatprep.mubr.f32.mxu0 0.0
      %506 = vmatmul.mubr.f32.gmra.mxu0 %v335
      %v507 = vpop.f32.mrf.mxu0
      %v508 = vadd.f32 %v321, %v507
      %v509 = vpop.f32.mrf.mxu0
      %v510 = vadd.f32 %v321, %v509
      %511 = vmatprep.mubr.f32.mxu0 0.0
      %512 = vmatmul.mubr.f32.gmra.mxu0 %v338
      %v513 = vpop.f32.mrf.mxu0
      %v514 = vadd.f32 %v325, %v513
      %v515 = vpop.f32.mrf.mxu0
      %v516 = vadd.f32 %v325, %v515
      %517 = vdwg.mxu0
      %v518 = vtanh.pop %v407
      %v519 = vtanh.pop %v409
      %v520 = vtanh.pop %v496
      %v521 = vtanh.pop %v498
      %v522 = vtanh.pop %v413
      %v523 = vtanh.pop %v415
      %v524 = vtanh.pop %v502
      %v525 = vtanh.pop %v504
      %v526 = vtanh.pop %v419
      %v527 = vtanh.pop %v421
      %v528 = vtanh.pop %v508
      %v529 = vtanh.pop %v510
      %v530 = vtanh.pop %v425
      %v531 = vtanh.pop %v427
      %v532 = vtanh.pop %v514
      %v533 = vtanh.pop %v516
      %534 = vset.pattern.permute.xlu0 3
      %535 = vperm.xlu0 %534, %v202
      %v536 = vpop.permute.xlu0 %535
      %538 = vset.pattern.permute.xlu0 3
      %539 = vperm.xlu0 %538, %v203
      %v540 = vpop.permute.xlu0 %539
      %542 = vset.pattern.permute.xlu0 3
      %543 = vperm.xlu0 %542, %v204
      %v544 = vpop.permute.xlu0 %543
      %546 = vset.pattern.permute.xlu0 3
      %547 = vperm.xlu0 %546, %v205
      %v548 = vpop.permute.xlu0 %547
      %v550 = vmul.f32 %v536, %v518
      %v551 = vmul.f32 %v536, %v519
      %v552 = vmul.f32 %v536, %v520
      %v553 = vmul.f32 %v536, %v521
      %v554 = vmul.f32 %v540, %v522
      %v555 = vmul.f32 %v540, %v523
      %v556 = vmul.f32 %v540, %v524
      %v557 = vmul.f32 %v540, %v525
      %v558 = vmul.f32 %v544, %v526
      %v559 = vmul.f32 %v544, %v527
      %v560 = vmul.f32 %v544, %v528
      %v561 = vmul.f32 %v544, %v529
      %v562 = vmul.f32 %v548, %v530
      %v563 = vmul.f32 %v548, %v531
      %v564 = vmul.f32 %v548, %v532
      %v565 = vmul.f32 %v548, %v533
      %v566 = vadd.f32 %v550, %v554
      %v567 = vadd.f32 %v566, %v558
      %v568 = vadd.f32 %v567, %v562
      %v569 = vrot.slane %v568, 4
      %v570 = vadd.f32 %v568, %v569
      %v571 = vrot.slane %v570, 2
      %v572 = vadd.f32 %v570, %v571
      %v573 = vrot.slane %v572, 1
      %v574 = vadd.f32 %v572, %v573
      %v575 = vadd.f32 %v551, %v555
      %v576 = vadd.f32 %v575, %v559
      %v577 = vadd.f32 %v576, %v563
      %v578 = vrot.slane %v577, 4
      %v579 = vadd.f32 %v577, %v578
      %v580 = vrot.slane %v579, 2
      %v581 = vadd.f32 %v579, %v580
      %v582 = vrot.slane %v581, 1
      %v583 = vadd.f32 %v581, %v582
      %v584 = vadd.f32 %v552, %v556
      %v585 = vadd.f32 %v584, %v560
      %v586 = vadd.f32 %v585, %v564
      %v587 = vrot.slane %v586, 4
      %v588 = vadd.f32 %v586, %v587
      %v589 = vrot.slane %v588, 2
      %v590 = vadd.f32 %v588, %v589
      %v591 = vrot.slane %v590, 1
      %v592 = vadd.f32 %v590, %v591
      %v593 = vadd.f32 %v553, %v557
      %v594 = vadd.f32 %v593, %v561
      %v595 = vadd.f32 %v594, %v565
      %v596 = vrot.slane %v595, 4
      %v597 = vadd.f32 %v595, %v596
      %v598 = vrot.slane %v597, 2
      %v599 = vadd.f32 %v597, %v598
      %v600 = vrot.slane %v599, 1
      %v601 = vadd.f32 %v599, %v600
      %s602 = sld [smem:[#allocation2]]
      %v603 = vstv %s602
      %v604 = vadd.f32 %v574, %v603
      %v605 = vadd.f32 %v583, %v603
      %v606 = vadd.f32 %v592, %v603
      %v607 = vadd.f32 %v601, %v603
      %v612 = vcombine.low %v604, %v605
      %v613 = vcombine.low %v606, %v607
      %v615 = vunpack.c.l.s4 1966171168
      %v616 = vunpack.c.0.s8 %v615
      %v617 = vlaneseq
      %v618 = vshrl.u32 %v617, 7
      %v619 = vsub.s32 %v616, %v618
      %v620 = vrot.slane %v612, %v619
      %v622 = vunpack.c.l.s4 1966171168
      %v623 = vunpack.c.0.s8 %v622
      %v624 = vlaneseq
      %v625 = vshrl.u32 %v624, 7
      %v626 = vsub.s32 %v623, %v625
      %v627 = vrot.slane %v613, %v626
      %v628 = vcombine.low %v620, %v627
      %v630 = vunpack.c.l.s4 1966171168
      %v631 = vunpack.c.0.s8 %v630
      %v632 = vlaneseq
      %v633 = vshrl.u32 %v632, 7
      %v634 = vsub.s32 %v631, %v633
      %v635 = vrot.slane %v628, %v634
      %v637 = vlaneseq
      %vm638 = vcmp.ge.s32.totalorder %v637, 0
      %vm639 = vcmp.lt.s32.totalorder %v637, 512
      %vm640 = vmand %vm638, %vm639
      %641 = vst.msk [vmem:[%s195] sm:$0xf] %vm640, %v635
      %s642 = smul.u32 4, %s16
      %p643 = scmp.lt.s32.totalorder %s642, 7
      %s644 = scalar_select %p643, %s642, 7
      %s645 = scalar_lea.vmem %s4, %s644
      // Predicated region
      $region37: #{ode_net_forward.1} parent=35 // pred_check
        %p646 = pneg %p123
      $region38: #{ode_net_forward.1} parent=35 // pred_check_branch
        %648 = sbr.rel (%p646) target = $region40
      $region39: #{ode_net_forward.1} parent=35 // pred_region
        %s649 = smul.u32 4, %s16
      $region40: #{ode_net_forward.1} parent=35 // pred_fallthru
        _
    $region36: #{ode_net_forward.1} parent=5 // pred_fallthru
      _
    %p650 = scmp.le.s32.totalorder 2, %s11
    // Predicated region
    $region41: #{ode_net_forward.1} parent=5 // pred_check
      %p651 = pneg %p650
    $region42: #{ode_net_forward.1} parent=5 // pred_check_branch
      %653 = sbr.rel (%p651) target = $region44
    $region43: #{ode_net_forward.1} parent=5 // pred_region
      %s654 = ssub.s32 %s11, 2
      // Predicated region
      $region45: #{ode_net_forward.1} parent=43 // pred_check
        %p655 = pneg %p129
      $region46: #{ode_net_forward.1} parent=43 // pred_check_branch
        %657 = sbr.rel (%p655) target = $region48
      $region47: #{ode_net_forward.1} parent=43 // pred_region
        %s658 = smul.u32 4, %s17
        %p659 = scmp.lt.s32.totalorder %s658, 7
        %s660 = scalar_select %p659, %s658, 7
        %s661 = scalar_lea.vmem %s4, %s660
      $region48: #{ode_net_forward.1} parent=43 // pred_fallthru
        _
    $region44: #{ode_net_forward.1} parent=5 // pred_fallthru
      _
  $region6: #{ode_net_forward.1} parent=0 // loop_footer
    %s15 = sadd.s32 1, %s11
  $region7: #{ode_net_forward.1} parent=0 // loop_footer_branch
    %10 = sbr.rel target = $region3
  $region8: #{ode_net_forward.1} parent=0 // loop_exit
    _

</llo_original>
